<compile_context>
chip_gen: v5e
topology: v5e:2x2
jax: 0.10.0
libtpu: 0.0.40
codegen_flags: <defaults>
</compile_context>

<pallas_src>
import math
import functools

import jax
import jax.numpy as jnp
from jax.experimental import pallas as pl
from jax.experimental.pallas import tpu as pltpu


def _bert_self_attention_kernel(x_ref, wqkv_ref, bqkv_ref, mask_ref, out_ref,
                                *, num_heads, head_size, hidden_size):
    # x_ref:    [S, H]   bf16  (leading batch dim squeezed by BlockSpec)
    # wqkv_ref: [H, 3H]  bf16  (stored [in, out]: y = x @ W + b)
    # bqkv_ref: [1, 3H]  f32
    # mask_ref: [1, S]   f32   (additive mask, broadcasts over heads & rows)
    # out_ref:  [S, H]
    S = x_ref.shape[0]
    H = hidden_size

    x = x_ref[...]                                        # bf16 [S, H]

    # Fused Q/K/V projection: single MXU pass with N = 3H, f32 accumulation.
    qkv = jnp.dot(x, wqkv_ref[...],
                  preferred_element_type=jnp.float32) + bqkv_ref[...]

    q = qkv[:, 0 * H:1 * H]                               # f32 [S, H]
    k = qkv[:, 1 * H:2 * H]
    v = qkv[:, 2 * H:3 * H]

    def to_heads(t):                                      # [S, H] -> [nh, S, d]
        return jnp.transpose(t.reshape(S, num_heads, head_size), (1, 0, 2))

    q_h = to_heads(q).astype(jnp.bfloat16)
    k_h = to_heads(k).astype(jnp.bfloat16)
    v_h = to_heads(v).astype(jnp.bfloat16)

    scale = 1.0 / math.sqrt(head_size)
    # Head-batched scores: [nh, S, S], f32 accumulation on the MXU.
    scores = jnp.einsum("hqd,hkd->hqk", q_h, k_h,
                        preferred_element_type=jnp.float32) * scale
    scores = scores + mask_ref[...]                       # [1, S] broadcast

    # Softmax over the key axis, in f32.
    m = jnp.max(scores, axis=-1, keepdims=True)
    e = jnp.exp(scores - m)
    denom = jnp.sum(e, axis=-1, keepdims=True)
    probs = e * pl.reciprocal(denom, approx=True)
    # NOTE: eval-mode forward -> nn.Dropout is identity, head_mask is None.
    # TODO(synk): training-mode attention dropout / head_mask not implemented.

    ctx = jnp.einsum("hqk,hkd->hqd", probs.astype(jnp.bfloat16), v_h,
                     preferred_element_type=jnp.float32)  # [nh, S, d]

    # Merge heads and emit a single lane-dense [S, H] store.
    merged = jnp.transpose(ctx, (1, 0, 2)).reshape(S, H)
    out_ref[...] = merged.astype(out_ref.dtype)


def bert_self_attention(hidden_states, attention_mask, params,
                        num_heads, head_size):
    """hidden_states: [B, S, H] f32, attention_mask: [B, S] f32 (additive)."""
    B, S, H = hidden_states.shape
    assert num_heads * head_size == H

    # Fuse Q/K/V weights ([in, out] so x @ W + b == PyTorch x @ W_lin.T + b)
    # and cast matmul operands to bf16 in the wrapper (halves weight/act DMA).
    w_qkv = jnp.concatenate([params["wq"], params["wk"], params["wv"]],
                            axis=1).astype(jnp.bfloat16)          # [H, 3H]
    b_qkv = jnp.concatenate([params["bq"], params["bk"], params["bv"]],
                            axis=0).reshape(1, 3 * H).astype(jnp.float32)
    x = hidden_states.astype(jnp.bfloat16)
    mask = attention_mask.reshape(B, 1, S).astype(jnp.float32)

    kernel = functools.partial(_bert_self_attention_kernel,
                               num_heads=num_heads, head_size=head_size,
                               hidden_size=H)

    # Advisory cost estimate for XLA scheduling around the custom call.
    flops = 2 * B * S * H * (3 * H) + 2 * 2 * B * num_heads * S * S * head_size
    bytes_accessed = (x.size * 2 + w_qkv.size * 2 + b_qkv.size * 4
                      + mask.size * 4 + B * S * H * 4)
    cost = pl.CostEstimate(flops=flops,
                           transcendentals=B * num_heads * S * S,
                           bytes_accessed=bytes_accessed)

    out = pl.pallas_call(
        kernel,
        out_shape=jax.ShapeDtypeStruct((B, S, H), hidden_states.dtype),
        grid_spec=pltpu.PrefetchScalarGridSpec(
            num_scalar_prefetch=0,
            grid=(B,),
            in_specs=[
                pl.BlockSpec((None, S, H), lambda b: (b, 0, 0)),  # x (batch squeezed)
                pl.BlockSpec((H, 3 * H), lambda b: (0, 0)),       # fused W_qkv
                pl.BlockSpec((1, 3 * H), lambda b: (0, 0)),       # fused b_qkv
                pl.BlockSpec((None, 1, S), lambda b: (b, 0, 0)),  # additive mask
            ],
            out_specs=pl.BlockSpec((None, S, H), lambda b: (b, 0, 0)),
        ),
        compiler_params=pltpu.CompilerParams(
            dimension_semantics=("parallel",),
            vmem_limit_bytes=32 * 1024 * 1024),
        cost_estimate=cost,
    )(x, w_qkv, b_qkv, mask)
    return out


def _reference_bf16(hidden_states, attention_mask, params, num_heads, head_size):
    """Pure-JAX reference mirroring the kernel's bf16/f32 mixed precision."""
    B, S, H = hidden_states.shape
    x = hidden_states.astype(jnp.bfloat16)
    w_qkv = jnp.concatenate([params["wq"], params["wk"], params["wv"]],
                            axis=1).astype(jnp.bfloat16)
    b_qkv = jnp.concatenate([params["bq"], params["bk"], params["bv"]], axis=0)
    qkv = jnp.einsum("bsh,hf->bsf", x, w_qkv,
                     preferred_element_type=jnp.float32) + b_qkv
    q, k, v = qkv[..., :H], qkv[..., H:2 * H], qkv[..., 2 * H:]

    def split(t):  # [B,S,H] -> [B,nh,S,d]
        return t.reshape(B, S, num_heads, head_size).transpose(0, 2, 1, 3)

    qh = split(q).astype(jnp.bfloat16)
    kh = split(k).astype(jnp.bfloat16)
    vh = split(v).astype(jnp.bfloat16)
    scores = jnp.einsum("bhqd,bhkd->bhqk", qh, kh,
                        preferred_element_type=jnp.float32) / math.sqrt(head_size)
    scores = scores + attention_mask[:, None, None, :]
    probs = jax.nn.softmax(scores, axis=-1)
    ctx = jnp.einsum("bhqk,bhkd->bhqd", probs.astype(jnp.bfloat16), vh,
                     preferred_element_type=jnp.float32)
    return ctx.transpose(0, 2, 1, 3).reshape(B, S, H).astype(hidden_states.dtype)


def _reference_f32(hidden_states, attention_mask, params, num_heads, head_size):
    """Full-f32 reference mirroring the PyTorch forward (eval mode)."""
    B, S, H = hidden_states.shape
    q = hidden_states @ params["wq"] + params["bq"]
    k = hidden_states @ params["wk"] + params["bk"]
    v = hidden_states @ params["wv"] + params["bv"]

    def split(t):
        return t.reshape(B, S, num_heads, head_size).transpose(0, 2, 1, 3)

    q, k, v = split(q), split(k), split(v)
    scores = jnp.einsum("bhqd,bhkd->bhqk", q, k) / math.sqrt(head_size)
    scores = scores + attention_mask[:, None, None, :]
    probs = jax.nn.softmax(scores, axis=-1)
    ctx = jnp.einsum("bhqk,bhkd->bhqd", probs, v)
    return ctx.transpose(0, 2, 1, 3).reshape(B, S, H)


if __name__ == "__main__":
    # Small config: hidden=32, heads=4 (head_size=8), batch=2, seq=8.
    B, S, H = 2, 8, 32
    NUM_HEADS, HEAD_SIZE = 4, 8

    key = jax.random.PRNGKey(0)
    k_x, k_m, kq_w, kq_b, kk_w, kk_b, kv_w, kv_b = jax.random.split(key, 8)

    hidden_states = jax.random.normal(k_x, (B, S, H), dtype=jnp.float32)
    # Additive attention mask (0 = attend, -10000 = masked), as in BERT.
    mask_bits = jax.random.bernoulli(k_m, p=0.9, shape=(B, S))
    attention_mask = jnp.where(mask_bits, 0.0, -10000.0).astype(jnp.float32)

    scale = 0.02
    params = {
        # Weights stored as [in, out] so the kernel computes x @ W + b
        # (equivalent to PyTorch's x @ W_linear.T + b).
        "wq": scale * jax.random.normal(kq_w, (H, H), dtype=jnp.float32),
        "bq": scale * jax.random.normal(kq_b, (H,), dtype=jnp.float32),
        "wk": scale * jax.random.normal(kk_w, (H, H), dtype=jnp.float32),
        "bk": scale * jax.random.normal(kk_b, (H,), dtype=jnp.float32),
        "wv": scale * jax.random.normal(kv_w, (H, H), dtype=jnp.float32),
        "bv": scale * jax.random.normal(kv_b, (H,), dtype=jnp.float32),
    }

    out = bert_self_attention(hidden_states, attention_mask, params,
                              NUM_HEADS, HEAD_SIZE)
    out = jax.block_until_ready(out)
    assert out.shape == (B, S, H)

    # Check against a precision-matched reference (tight tolerance) ...
    ref_bf16 = _reference_bf16(hidden_states, attention_mask, params,
                               NUM_HEADS, HEAD_SIZE)
    assert jnp.allclose(out, ref_bf16, atol=2e-3, rtol=2e-3), "bf16 ref mismatch"

    # ... and against the full-f32 PyTorch-equivalent forward (loose tolerance,
    # accounts for bf16 matmul inputs).
    ref_f32 = _reference_f32(hidden_states, attention_mask, params,
                             NUM_HEADS, HEAD_SIZE)
    assert jnp.allclose(out, ref_f32, atol=2e-2, rtol=2e-2), "f32 ref mismatch"

    print("KERNEL_OK")
</pallas_src>

<mosaic_0001>
module attributes {stable_mosaic.version = 11 : i64} {
  func.func @_bert_self_attention_kernel(%arg0: i32, %arg1: memref<1x8x32xbf16, #tpu.memory_space<vmem>>, %arg2: memref<32x96xbf16, #tpu.memory_space<vmem>>, %arg3: memref<1x96xf32, #tpu.memory_space<vmem>>, %arg4: memref<1x1x8xf32, #tpu.memory_space<vmem>>, %arg5: memref<1x8x32xf32, #tpu.memory_space<vmem>>) attributes {dimension_semantics = [#tpu.dimension_semantics<parallel>], iteration_bounds = array<i64: 2>, scalar_prefetch = 0 : i64, scratch_operands = 0 : i64, tpu.core_type = #tpu.core_type<tc>, window_params = [{transform_indices = @transform_0, window_bounds = array<i64: 1, 8, 32>}, {pipeline_mode = #tpu.pipeline_mode<synchronous>, transform_indices = @transform_1, window_bounds = array<i64: 32, 96>}, {pipeline_mode = #tpu.pipeline_mode<synchronous>, transform_indices = @transform_2, window_bounds = array<i64: 1, 96>}, {transform_indices = @transform_3, window_bounds = array<i64: 1, 1, 8>}, {transform_indices = @transform_4, window_bounds = array<i64: 1, 8, 32>}]} {
    %c0 = arith.constant 0 : index
    %c0_0 = arith.constant 0 : index
    %c0_1 = arith.constant 0 : index
    %0 = vector.load %arg1[%c0, %c0_0, %c0_1] : memref<1x8x32xbf16, #tpu.memory_space<vmem>>, vector<1x8x32xbf16>
    %1 = vector.shape_cast %0 : vector<1x8x32xbf16> to vector<8x32xbf16>
    %c0_2 = arith.constant 0 : index
    %c0_3 = arith.constant 0 : index
    %2 = vector.load %arg2[%c0_2, %c0_3] : memref<32x96xbf16, #tpu.memory_space<vmem>>, vector<32x96xbf16>
    %cst = arith.constant dense<0.000000e+00> : vector<8x96xf32>
    %3 = tpu.matmul %1, %2, %cst {dimension_numbers = #tpu.dot_dimension_numbers<[1], [0], [0], [1], [0, 0, 1, 1], [], []>} : vector<8x32xbf16>, vector<32x96xbf16>, vector<8x96xf32> -> vector<8x96xf32>
    %c0_4 = arith.constant 0 : index
    %c0_5 = arith.constant 0 : index
    %4 = vector.load %arg3[%c0_4, %c0_5] : memref<1x96xf32, #tpu.memory_space<vmem>>, vector<1x96xf32>
    %5 = vector.broadcast %4 : vector<1x96xf32> to vector<8x96xf32>
    %6 = arith.addf %3, %5 : vector<8x96xf32>
    %7 = vector.extract_strided_slice %6 {offsets = [0, 0], sizes = [8, 32], strides = [1, 1]} : vector<8x96xf32> to vector<8x32xf32>
    %8 = vector.extract_strided_slice %6 {offsets = [0, 32], sizes = [8, 32], strides = [1, 1]} : vector<8x96xf32> to vector<8x32xf32>
    %9 = vector.extract_strided_slice %6 {offsets = [0, 64], sizes = [8, 32], strides = [1, 1]} : vector<8x96xf32> to vector<8x32xf32>
    %10 = vector.shape_cast %7 : vector<8x32xf32> to vector<8x4x8xf32>
    %11 = tpu.transpose %10, [1, 0, 2] : vector<8x4x8xf32> -> vector<4x8x8xf32>
    %12 = arith.truncf %11 : vector<4x8x8xf32> to vector<4x8x8xbf16>
    %13 = vector.shape_cast %8 : vector<8x32xf32> to vector<8x4x8xf32>
    %14 = tpu.transpose %13, [1, 0, 2] : vector<8x4x8xf32> -> vector<4x8x8xf32>
    %15 = arith.truncf %14 : vector<4x8x8xf32> to vector<4x8x8xbf16>
    %16 = vector.shape_cast %9 : vector<8x32xf32> to vector<8x4x8xf32>
    %17 = tpu.transpose %16, [1, 0, 2] : vector<8x4x8xf32> -> vector<4x8x8xf32>
    %18 = arith.truncf %17 : vector<4x8x8xf32> to vector<4x8x8xbf16>
    "tpu.trace_start"() <{level = 10 : i32, message = "hqd,hkd->hqk"}> : () -> ()
    %cst_6 = arith.constant dense<0.000000e+00> : vector<4x8x8xf32>
    %19 = tpu.matmul %12, %15, %cst_6 {dimension_numbers = #tpu.dot_dimension_numbers<[2], [2], [1], [1], [0, 0, 0, 1, 1, 1], [0], [0]>} : vector<4x8x8xbf16>, vector<4x8x8xbf16>, vector<4x8x8xf32> -> vector<4x8x8xf32>
    "tpu.trace_stop"() : () -> ()
    %cst_7 = arith.constant 0.353553385 : f32
    %20 = vector.broadcast %cst_7 : f32 to vector<4x8x8xf32>
    %21 = arith.mulf %19, %20 : vector<4x8x8xf32>
    %c0_8 = arith.constant 0 : index
    %c0_9 = arith.constant 0 : index
    %c0_10 = arith.constant 0 : index
    %22 = vector.load %arg4[%c0_8, %c0_9, %c0_10] : memref<1x1x8xf32, #tpu.memory_space<vmem>>, vector<1x1x8xf32>
    %23 = vector.shape_cast %22 : vector<1x1x8xf32> to vector<1x8xf32>
    %24 = vector.shape_cast %23 : vector<1x8xf32> to vector<1x1x8xf32>
    %25 = vector.broadcast %24 : vector<1x1x8xf32> to vector<4x8x8xf32>
    %26 = arith.addf %21, %25 : vector<4x8x8xf32>
    %cst_11 = arith.constant dense<0xFF800000> : vector<4x8xf32>
    %27 = vector.multi_reduction <maximumf>, %26, %cst_11 [2] : vector<4x8x8xf32> to vector<4x8xf32>
    %28 = vector.shape_cast %27 : vector<4x8xf32> to vector<4x8x1xf32>
    %29 = vector.broadcast %28 : vector<4x8x1xf32> to vector<4x8x8xf32>
    %30 = arith.subf %26, %29 : vector<4x8x8xf32>
    %31 = math.exp %30 : vector<4x8x8xf32>
    %cst_12 = arith.constant dense<0.000000e+00> : vector<4x8xf32>
    %32 = vector.multi_reduction <add>, %31, %cst_12 [2] : vector<4x8x8xf32> to vector<4x8xf32>
    %33 = vector.shape_cast %32 : vector<4x8xf32> to vector<4x8x1xf32>
    %34 = tpu.reciprocal %33 {approx = true} : vector<4x8x1xf32> -> vector<4x8x1xf32>
    %35 = vector.broadcast %34 : vector<4x8x1xf32> to vector<4x8x8xf32>
    %36 = arith.mulf %31, %35 : vector<4x8x8xf32>
    %37 = arith.truncf %36 : vector<4x8x8xf32> to vector<4x8x8xbf16>
    "tpu.trace_start"() <{level = 10 : i32, message = "hqk,hkd->hqd"}> : () -> ()
    %cst_13 = arith.constant dense<0.000000e+00> : vector<4x8x8xf32>
    %38 = tpu.matmul %37, %18, %cst_13 {dimension_numbers = #tpu.dot_dimension_numbers<[2], [1], [1], [2], [0, 0, 0, 1, 1, 2], [0], [0]>} : vector<4x8x8xbf16>, vector<4x8x8xbf16>, vector<4x8x8xf32> -> vector<4x8x8xf32>
    "tpu.trace_stop"() : () -> ()
    %39 = tpu.transpose %38, [1, 0, 2] : vector<4x8x8xf32> -> vector<8x4x8xf32>
    %40 = vector.shape_cast %39 : vector<8x4x8xf32> to vector<8x32xf32>
    %c0_14 = arith.constant 0 : index
    %c0_15 = arith.constant 0 : index
    %c0_16 = arith.constant 0 : index
    %41 = vector.load %arg5[%c0_14, %c0_15, %c0_16] : memref<1x8x32xf32, #tpu.memory_space<vmem>>, vector<1x8x32xf32>
    %42 = vector.shape_cast %41 : vector<1x8x32xf32> to vector<8x32xf32>
    %43 = vector.shape_cast %40 : vector<8x32xf32> to vector<1x8x32xf32>
    tpu.vector_store %arg5[%c0_14, %c0_15, %c0_16], %43 {strides = array<i32>} : memref<1x8x32xf32, #tpu.memory_space<vmem>>, vector<1x8x32xf32>,
    return
  }
  func.func @transform_0(%arg0: i32) -> (i32, i32, i32) {
    %c0_i32 = arith.constant 0 : i32
    %c0_i32_0 = arith.constant 0 : i32
    %c0_i32_1 = arith.constant 0 : i32
    return %arg0, %c0_i32, %c0_i32_0 : i32, i32, i32
  }
  func.func @transform_1(%arg0: i32) -> (i32, i32) {
    %c0_i32 = arith.constant 0 : i32
    %c0_i32_0 = arith.constant 0 : i32
    %c0_i32_1 = arith.constant 0 : i32
    return %c0_i32, %c0_i32_0 : i32, i32
  }
  func.func @transform_2(%arg0: i32) -> (i32, i32) {
    %c0_i32 = arith.constant 0 : i32
    %c0_i32_0 = arith.constant 0 : i32
    %c0_i32_1 = arith.constant 0 : i32
    return %c0_i32, %c0_i32_0 : i32, i32
  }
  func.func @transform_3(%arg0: i32) -> (i32, i32, i32) {
    %c0_i32 = arith.constant 0 : i32
    %c0_i32_0 = arith.constant 0 : i32
    %c0_i32_1 = arith.constant 0 : i32
    return %arg0, %c0_i32, %c0_i32_0 : i32, i32, i32
  }
  func.func @transform_4(%arg0: i32) -> (i32, i32, i32) {
    %c0_i32 = arith.constant 0 : i32
    %c0_i32_0 = arith.constant 0 : i32
    %c0_i32_1 = arith.constant 0 : i32
    return %arg0, %c0_i32, %c0_i32_0 : i32, i32, i32
  }
}

</mosaic_0001>

<llo_original>
// kernel: tpu_custom_call.1
$region0: #{tpu_custom_call.1}
  #allocation0 [shape = 'u32[]', space=smem, size = 0x4, offset = 0x4, fixed_abs, tag = 'smem constant byte address 0x4 - core index']
  #allocation1 [shape = 'u32[72,128]{1,0:T(1,128)}', space=vmem, size = 0x9000, scoped, tag = 'internal scratch']
  %s0 = inlined_call_operand.hbm [shape: bf16[2,8,32], index: 0, kind: input, shape index: {}]
  %s1 = inlined_call_operand.hbm [shape: bf16[32,96], index: 1, kind: input, shape index: {}]
  %s2 = inlined_call_operand.hbm [shape: f32[1,96], index: 2, kind: input, shape index: {}]
  %s3 = inlined_call_operand.vmem [shape: f32[2,1,8], index: 3, kind: input, shape index: {}]
  %s4 = inlined_call_operand.hbm [shape: f32[2,8,32], index: 4, kind: output, shape index: {}]
  %s5 = sld [smem:[#allocation0]]
  $region61: #{tpu_custom_call.1} parent=0
    _
  %s7 = ssub.s32 1, %s5
  %s8 = scalar_select 0, %s7, %s5
  $region1: #{tpu_custom_call.1} parent=0
    #allocation2 [shape = 'u8[4096]{0}', space=vmem, size = 0x1000, scoped, tag = 'input window, operand 0']
    #allocation3 [shape = 's32[2]{0}', space=sflag, size = 0x8, scoped, tag = 'scoped memory for tpu_custom_call.1']
    #allocation4 [shape = 's32[2]{0}', space=sflag, size = 0x8, scoped, tag = 'scoped memory for tpu_custom_call.1']
    #allocation5 [shape = 'u8[8192]{0}', space=vmem, size = 0x2000, scoped, tag = 'input window, operand 1, single buffered']
    #allocation6 [shape = 's32[1]{0}', space=sflag, size = 0x4, scoped, tag = 'scoped memory for tpu_custom_call.1']
    #allocation7 [shape = 'u8[512]{0}', space=vmem, size = 0x400, scoped, tag = 'input window, operand 2, single buffered']
    #allocation8 [shape = 'u8[8192]{0}', space=vmem, size = 0x2000, scoped, tag = 'output window, operand 0']
    %9 = vsyncpa [#allocation3], 0
    %s10 = scalar_lea.sflag [#allocation3], 1
    %11 = vsyncpa %s10, 0
    %12 = vsyncpa [#allocation6], 0
    %13 = vsyncpa [#allocation4], 0
    %s14 = scalar_lea.sflag [#allocation4], 1
    %15 = vsyncpa %s14, 0
    loop: start=0, step=1, limit=4
    $region2: #{tpu_custom_call.1} parent=1 // loop_pre_header
      _
    $region3: #{tpu_custom_call.1} parent=1 // loop_header
      %s17 = sphi 0, %s21
      %p18 = scmp.ge.s32.totalorder %s17, 4
      %s27 = sphi 0, %s29
      %s30 = sphi 0, %s27
      %s31 = sphi 0, %s30
      %s47 = sphi 0, %s31
      %s51 = sphi 0, %s51
      %s53 = sphi 0, %s51
      %s54 = sphi 0, %s53
      %s68 = sphi 0, %s54
      %s72 = sphi 0, %s72
      %s74 = sphi 0, %s72
      %s75 = sphi 0, %s74
      %s89 = sphi 0, %s75
      %s95 = sphi 0, %s97
      %s98 = sphi 0, %s95
      %s99 = sphi 0, %s98
      %s115 = sphi 0, %s99
      %s121 = sphi 0, %s123
      %s124 = sphi 0, %s121
      %s125 = sphi 0, %s124
      %s141 = sphi 0, %s125
    $region4: #{tpu_custom_call.1} parent=1 // loop_header_branch
      %20 = sbr.rel (%p18) target = $region8
    $region5: #{tpu_custom_call.1} parent=1 // loop_body
      %s22 = ssub.s32 %s17, 1
      %s23 = ssub.s32 %s17, 2
      %s24 = sadd.s32 %s17, 1
      %s25 = ssub.s32 %s17, %s24
      %p26 = scmp.eq.s32.totalorder %s25, 0
      %s28 = sadd.s32 %s27, 1
      %s29 = scalar_select %p26, %s27, %s28
      %p32 = pneg %p26
      %p33 = scmp.eq.s32.totalorder %s17, 1
      %p34 = por %p32, %p33
      %p35 = scmp.ne.s32.totalorder %s27, %s30
      %p36 = scmp.eq.s32.totalorder %s17, 0
      %p37 = por %p35, %p36
      %p38 = scmp.ne.s32.totalorder %s27, %s30
      %p39 = scmp.eq.s32.totalorder %s22, 1
      %p40 = por %p38, %p39
      %p41 = scmp.ne.s32.totalorder %s30, %s31
      %p42 = scmp.eq.s32.totalorder %s22, 0
      %p43 = por %p41, %p42
      %p44 = scmp.ne.s32.totalorder %s30, %s31
      %p45 = scmp.eq.s32.totalorder %s23, 1
      %p46 = por %p44, %p45
      %p48 = scmp.ne.s32.totalorder %s31, %s47
      %p49 = scmp.eq.s32.totalorder %s23, 0
      %p50 = por %p48, %p49
      %s52 = sadd.s32 %s51, 1
      %p55 = scmp.eq.s32.totalorder %s17, 1
      %p56 = scmp.ne.s32.totalorder %s51, %s53
      %p57 = scmp.eq.s32.totalorder %s17, 0
      %p58 = por %p56, %p57
      %p59 = scmp.ne.s32.totalorder %s51, %s53
      %p60 = scmp.eq.s32.totalorder %s22, 1
      %p61 = por %p59, %p60
      %p62 = scmp.ne.s32.totalorder %s53, %s54
      %p63 = scmp.eq.s32.totalorder %s22, 0
      %p64 = por %p62, %p63
      %p65 = scmp.ne.s32.totalorder %s53, %s54
      %p66 = scmp.eq.s32.totalorder %s23, 1
      %p67 = por %p65, %p66
      %p69 = scmp.ne.s32.totalorder %s54, %s68
      %p70 = scmp.eq.s32.totalorder %s23, 0
      %p71 = por %p69, %p70
      %s73 = sadd.s32 %s72, 1
      %p76 = scmp.eq.s32.totalorder %s17, 1
      %p77 = scmp.ne.s32.totalorder %s72, %s74
      %p78 = scmp.eq.s32.totalorder %s17, 0
      %p79 = por %p77, %p78
      %p80 = scmp.ne.s32.totalorder %s72, %s74
      %p81 = scmp.eq.s32.totalorder %s22, 1
      %p82 = por %p80, %p81
      %p83 = scmp.ne.s32.totalorder %s74, %s75
      %p84 = scmp.eq.s32.totalorder %s22, 0
      %p85 = por %p83, %p84
      %p86 = scmp.ne.s32.totalorder %s74, %s75
      %p87 = scmp.eq.s32.totalorder %s23, 1
      %p88 = por %p86, %p87
      %p90 = scmp.ne.s32.totalorder %s75, %s89
      %p91 = scmp.eq.s32.totalorder %s23, 0
      %p92 = por %p90, %p91
      %s93 = ssub.s32 %s17, %s24
      %p94 = scmp.eq.s32.totalorder %s93, 0
      %s96 = sadd.s32 %s95, 1
      %s97 = scalar_select %p94, %s95, %s96
      %p100 = pneg %p94
      %p101 = scmp.eq.s32.totalorder %s17, 1
      %p102 = por %p100, %p101
      %p103 = scmp.ne.s32.totalorder %s95, %s98
      %p104 = scmp.eq.s32.totalorder %s17, 0
      %p105 = por %p103, %p104
      %p106 = scmp.ne.s32.totalorder %s95, %s98
      %p107 = scmp.eq.s32.totalorder %s22, 1
      %p108 = por %p106, %p107
      %p109 = scmp.ne.s32.totalorder %s98, %s99
      %p110 = scmp.eq.s32.totalorder %s22, 0
      %p111 = por %p109, %p110
      %p112 = scmp.ne.s32.totalorder %s98, %s99
      %p113 = scmp.eq.s32.totalorder %s23, 1
      %p114 = por %p112, %p113
      %p116 = scmp.ne.s32.totalorder %s99, %s115
      %p117 = scmp.eq.s32.totalorder %s23, 0
      %p118 = por %p116, %p117
      %s119 = ssub.s32 %s17, %s24
      %p120 = scmp.eq.s32.totalorder %s119, 0
      %s122 = sadd.s32 %s121, 1
      %s123 = scalar_select %p120, %s121, %s122
      %p126 = pneg %p120
      %p127 = scmp.eq.s32.totalorder %s17, 1
      %p128 = por %p126, %p127
      %p129 = scmp.ne.s32.totalorder %s121, %s124
      %p130 = scmp.eq.s32.totalorder %s17, 0
      %p131 = por %p129, %p130
      %p132 = scmp.ne.s32.totalorder %s121, %s124
      %p133 = scmp.eq.s32.totalorder %s22, 1
      %p134 = por %p132, %p133
      %p135 = scmp.ne.s32.totalorder %s124, %s125
      %p136 = scmp.eq.s32.totalorder %s22, 0
      %p137 = por %p135, %p136
      %p138 = scmp.ne.s32.totalorder %s124, %s125
      %p139 = scmp.eq.s32.totalorder %s23, 1
      %p140 = por %p138, %p139
      %p142 = scmp.ne.s32.totalorder %s125, %s141
      %p143 = scmp.eq.s32.totalorder %s23, 0
      %p144 = por %p142, %p143
      %p145 = scmp.le.s32.totalorder 1, %s17
      %p146 = scmp.lt.s32.totalorder %s17, 3
      %p147 = pnand %p145, %p146
      %p148 = pneg %p147
      // Predicated region
      $region9: #{tpu_custom_call.1} parent=5 // pred_check
        _
      $region10: #{tpu_custom_call.1} parent=5 // pred_check_branch
        %150 = sbr.rel (%p147) target = $region12
      $region11: #{tpu_custom_call.1} parent=5 // pred_region
        %s151 = ssub.s32 %s17, 1
        // Predicated region
        $region13: #{tpu_custom_call.1} parent=11 // pred_check
          %p152 = pneg %p64
        $region14: #{tpu_custom_call.1} parent=11 // pred_check_branch
          %154 = sbr.rel (%p152) target = $region16
        $region15: #{tpu_custom_call.1} parent=11 // pred_region
          %156 = vsyncadd [#allocation6], 0
          %s157 = sshll.u32 %s1, 4
          %s158 = int_to_ptr.hbm [resolvable:$true] %s157
          %s159 = sshll.u32 [#allocation5], 4
          %s160 = int_to_ptr.vmem [resolvable:$true] %s159
          %165 = dma.hbm_to_vmem [thread:$0]  %s158, 256, %s160, [#allocation6], 64, 64, 4
        $region16: #{tpu_custom_call.1} parent=11 // pred_fallthru
          _
        // Predicated region
        $region17: #{tpu_custom_call.1} parent=11 // pred_check
          %p166 = pneg %p85
        $region18: #{tpu_custom_call.1} parent=11 // pred_check_branch
          %168 = sbr.rel (%p166) target = $region20
        $region19: #{tpu_custom_call.1} parent=11 // pred_region
          %170 = vsyncadd [#allocation6], 0
          %s172 = sshll.u32 %s2, 4
          %s173 = int_to_ptr.hbm [resolvable:$true] %s172
          %s174 = sshll.u32 [#allocation7], 4
          %s175 = int_to_ptr.vmem [resolvable:$true] %s174
          %177 = dma.hbm_to_vmem [thread:$0]  %s173, 16, %s175, [#allocation6]
        $region20: #{tpu_custom_call.1} parent=11 // pred_fallthru
          _
      $region12: #{tpu_custom_call.1} parent=5 // pred_fallthru
        _
      %p178 = scmp.lt.s32.totalorder %s17, 2
      // Predicated region
      $region21: #{tpu_custom_call.1} parent=5 // pred_check
        %p179 = pneg %p178
      $region22: #{tpu_custom_call.1} parent=5 // pred_check_branch
        %181 = sbr.rel (%p179) target = $region24
      $region23: #{tpu_custom_call.1} parent=5 // pred_region
        // Predicated region
        $region25: #{tpu_custom_call.1} parent=23 // pred_check
          %p182 = pneg %p37
        $region26: #{tpu_custom_call.1} parent=23 // pred_check_branch
          %184 = sbr.rel (%p182) target = $region28
        $region27: #{tpu_custom_call.1} parent=23 // pred_region
          %s185 = sand.u32 %s27, 1
          %s186 = scalar_lea.sflag [#allocation3], %s185
          %s187 = sand.u32 %s27, 1
          %s188 = smul.addr %s187, 4
          %s189 = scalar_lea.vmem [#allocation2], %s188
          %191 = vsyncadd %s186, 0
          %s192 = smul.addr %s17, 4
          %s193 = scalar_lea.hbm %s0, %s192
          %s195 = sshll.u32 %s193, 4
          %s196 = int_to_ptr.hbm [resolvable:$true] %s195
          %s197 = sshll.u32 %s189, 4
          %s198 = int_to_ptr.vmem [resolvable:$true] %s197
          %200 = dma.hbm_to_vmem [thread:$0]  %s196, 64, %s198, %s186
        $region28: #{tpu_custom_call.1} parent=23 // pred_fallthru
          _
        // Predicated region
        $region29: #{tpu_custom_call.1} parent=23 // pred_check
          %p201 = pneg %p105
        $region30: #{tpu_custom_call.1} parent=23 // pred_check_branch
          %203 = sbr.rel (%p201) target = $region32
        $region31: #{tpu_custom_call.1} parent=23 // pred_region
          %p204 = scmp.lt.s32.totalorder %s17, 1
          %s205 = scalar_select %p204, %s17, 1
          %s206 = scalar_lea.vmem %s3, %s205
        $region32: #{tpu_custom_call.1} parent=23 // pred_fallthru
          _
      $region24: #{tpu_custom_call.1} parent=5 // pred_fallthru
        _
      %p207 = scmp.le.s32.totalorder 1, %s17
      %p208 = scmp.lt.s32.totalorder %s17, 3
      %p209 = pnand %p207, %p208
      %p210 = pneg %p209
      // Predicated region
      $region33: #{tpu_custom_call.1} parent=5 // pred_check
        _
      $region34: #{tpu_custom_call.1} parent=5 // pred_check_branch
        %212 = sbr.rel (%p209) target = $region36
      $region35: #{tpu_custom_call.1} parent=5 // pred_region
        %s213 = ssub.s32 %s17, 1
        %s214 = sand.u32 %s30, 1
        %s215 = scalar_lea.sflag [#allocation3], %s214
        %s216 = sand.u32 %s30, 1
        %s217 = smul.addr %s216, 4
        %s218 = scalar_lea.vmem [#allocation2], %s217
        // Predicated region
        $region37: #{tpu_custom_call.1} parent=35 // pred_check
          %p219 = pneg %p43
        $region38: #{tpu_custom_call.1} parent=35 // pred_check_branch
          %221 = sbr.rel (%p219) target = $region40
        $region39: #{tpu_custom_call.1} parent=35 // pred_region
          %223 = dma.done %s215, 64
        $region40: #{tpu_custom_call.1} parent=35 // pred_fallthru
          _
        // Predicated region
        $region41: #{tpu_custom_call.1} parent=35 // pred_check
          %p224 = pneg %p64
        $region42: #{tpu_custom_call.1} parent=35 // pred_check_branch
          %226 = sbr.rel (%p224) target = $region44
        $region43: #{tpu_custom_call.1} parent=35 // pred_region
          %228 = dma.done [#allocation6], 256
        $region44: #{tpu_custom_call.1} parent=35 // pred_fallthru
          _
        // Predicated region
        $region45: #{tpu_custom_call.1} parent=35 // pred_check
          %p229 = pneg %p85
        $region46: #{tpu_custom_call.1} parent=35 // pred_check_branch
          %231 = sbr.rel (%p229) target = $region48
        $region47: #{tpu_custom_call.1} parent=35 // pred_region
          %233 = dma.done [#allocation6], 16
        $region48: #{tpu_custom_call.1} parent=35 // pred_fallthru
          _
        %s234 = sand.u32 %s30, 1
        %s235 = scalar_lea.sflag [#allocation3], %s234
        %s236 = sand.u32 %s30, 1
        %s237 = smul.addr %s236, 4
        %s238 = scalar_lea.vmem [#allocation2], %s237
        %p239 = pneg %p43
        %p240 = pneg %p40
        %p241 = pneg %p64
        %p242 = pneg %p61
        %p243 = pneg %p85
        %p244 = pneg %p82
        %p245 = scmp.lt.s32.totalorder %s22, 1
        %s246 = scalar_select %p245, %s22, 1
        %s247 = scalar_lea.vmem %s3, %s246
        %p248 = pneg %p111
        %p249 = pneg %p108
        %p250 = pneg %p137
        %p251 = pneg %p134
        %s252 = sand.u32 %s124, 1
        %s253 = scalar_lea.sflag [#allocation4], %s252
        %s254 = sand.u32 %s124, 1
        %s255 = smul.addr %s254, 8
        %s256 = scalar_lea.vmem [#allocation8], %s255
        %p257 = scmp.lt.s32.totalorder %s22, 1
        %s258 = scalar_select %p257, %s22, 1
        %s259 = scalar_lea.vmem %s3, %s258
        %v261 = vld [vmem:[%s218] sm:$0xf]
        %v262 = vld [vmem:[#allocation5] sm:$0xf]
        %v263 = vld [vmem:[#allocation5 + $0x4] sm:$0xf]
        %v264 = vld [vmem:[#allocation5 + $0x8] sm:$0xf]
        %v265 = vld [vmem:[#allocation5 + $0xc] sm:$0xf]
        %v266 = vld [vmem:[#allocation7] sm:$0x1]
        %v268 = vperm.slane %v266, 0
        %v274 = vunpack.c.l.b16 %v262
        %v275 = vunpack.c.l.b16 %v263
        %v276 = vunpack.c.l.b16 %v264
        %v277 = vunpack.c.l.b16 %v265
        %v278 = vpack.c.b16 %v275, %v274
        %v279 = vpack.c.b16 %v277, %v276
        %vm282 = vcmask 261120
        %v284 = vsel %vm282, %v261, 0
        %286 = vmatpush.bf16.msra.mxu0 0
        %287 = vmatpush.bf16.msra.mxu0 0
        %288 = vmatpush.bf16.msra.mxu0 0
        %289 = vmatpush.bf16.msra.mxu0 0
        %290 = vmatpush.bf16.msra.mxu0 0
        %291 = vmatpush.bf16.msra.mxu0 0
        %292 = vmatpush.bf16.msra.mxu0 %v279
        %293 = vmatpush.bf16.msra.mxu0 %v278
        %294 = vmatmul.bf16.gmra.mxu0 %v284
        %v295 = vpop.f32.mrf.mxu0
        %v296 = vadd.f32 %v268, %v295
        %v297 = vpop.f32.mrf.mxu0
        %298 = vdwg.mxu0
        %300 = vrot.lane.b32.xlu0 %v296, 120
        %v301 = vpop.permute.xlu0 %300
        %303 = vrot.lane.b32.xlu0 %v296, 112
        %v304 = vpop.permute.xlu0 %303
        %306 = vrot.lane.b32.xlu0 %v296, 104
        %v307 = vpop.permute.xlu0 %306
        %v309 = vrot.slane %v304, 4
        %vm310 = vcmask 1047556
        %v311 = vsel %vm310, %v309, %v296
        %v312 = vrot.slane %v296, 4
        %v313 = vsel %vm310, %v304, %v312
        %v315 = vunpack.c.l.s4 1983009808
        %v316 = vunpack.c.0.s8 %v315
        %v317 = vperm.slane %v311, %v316
        %v319 = vunpack.c.l.s4 1983009808
        %v320 = vunpack.c.0.s8 %v319
        %v321 = vperm.slane %v313, %v320
        %v322 = vrot.slane %v307, 4
        %v323 = vsel %vm310, %v322, %v301
        %v324 = vrot.slane %v301, 4
        %v325 = vsel %vm310, %v307, %v324
        %v327 = vunpack.c.l.s4 1983009808
        %v328 = vunpack.c.0.s8 %v327
        %v329 = vperm.slane %v323, %v328
        %v331 = vunpack.c.l.s4 1983009808
        %v332 = vunpack.c.0.s8 %v331
        %v333 = vperm.slane %v325, %v332
        %v334 = vrot.slane %v329, 4
        %v335 = vsel %vm310, %v334, %v317
        %v336 = vrot.slane %v317, 4
        %v337 = vsel %vm310, %v329, %v336
        %v339 = vunpack.c.l.s4 1934713408
        %v340 = vunpack.c.0.s8 %v339
        %v341 = vperm.slane %v335, %v340
        %v343 = vunpack.c.l.s4 1934713408
        %v344 = vunpack.c.0.s8 %v343
        %v345 = vperm.slane %v337, %v344
        %v346 = vrot.slane %v333, 4
        %v347 = vsel %vm310, %v346, %v321
        %v348 = vrot.slane %v321, 4
        %v349 = vsel %vm310, %v333, %v348
        %v351 = vunpack.c.l.s4 1934713408
        %v352 = vunpack.c.0.s8 %v351
        %v353 = vperm.slane %v347, %v352
        %v355 = vunpack.c.l.s4 1934713408
        %v356 = vunpack.c.0.s8 %v355
        %v357 = vperm.slane %v349, %v356
        %v358 = vrot.slane %v341, 4
        %v359 = vsel %vm310, 0.0, %v358
        %v360 = vrot.slane %v345, 4
        %v361 = vsel %vm310, 0.0, %v360
        %v362 = vrot.slane %v353, 4
        %v363 = vsel %vm310, 0.0, %v362
        %v364 = vrot.slane %v357, 4
        %v365 = vsel %vm310, 0.0, %v364
        %v366 = vsel %vm310, %v360, %v341
        %v368 = vunpack.c.l.s4 1983009808
        %v369 = vunpack.c.0.s8 %v368
        %v370 = vperm.slane %v366, %v369
        %v371 = vrot.slane %v361, 4
        %v372 = vsel %vm310, %v371, %v359
        %v374 = vunpack.c.l.s4 1983009808
        %v375 = vunpack.c.0.s8 %v374
        %v376 = vperm.slane %v372, %v375
        %v377 = vsel %vm310, %v364, %v353
        %v379 = vunpack.c.l.s4 1983009808
        %v380 = vunpack.c.0.s8 %v379
        %v381 = vperm.slane %v377, %v380
        %v382 = vrot.slane %v365, 4
        %v383 = vsel %vm310, %v382, %v363
        %v385 = vunpack.c.l.s4 1983009808
        %v386 = vunpack.c.0.s8 %v385
        %v387 = vperm.slane %v383, %v386
        %v388 = vrot.slane %v376, 4
        %v389 = vsel %vm310, %v388, %v370
        %v390 = vrot.slane %v370, 4
        %v391 = vsel %vm310, %v376, %v390
        %v393 = vunpack.c.l.s4 1934713408
        %v394 = vunpack.c.0.s8 %v393
        %v395 = vperm.slane %v389, %v394
        %v397 = vunpack.c.l.s4 1934713408
        %v398 = vunpack.c.0.s8 %v397
        %v399 = vperm.slane %v391, %v398
        %v400 = vrot.slane %v387, 4
        %v401 = vsel %vm310, %v400, %v381
        %v402 = vrot.slane %v381, 4
        %v403 = vsel %vm310, %v387, %v402
        %v405 = vunpack.c.l.s4 1934713408
        %v406 = vunpack.c.0.s8 %v405
        %v407 = vperm.slane %v401, %v406
        %v409 = vunpack.c.l.s4 1934713408
        %v410 = vunpack.c.0.s8 %v409
        %v411 = vperm.slane %v403, %v410
        %v412 = vrot.slane %v407, 4
        %v413 = vsel %vm310, %v412, %v395
        %v414 = vrot.slane %v395, 4
        %v415 = vsel %vm310, %v407, %v414
        %v416 = vrot.slane %v411, 4
        %v417 = vsel %vm310, %v416, %v399
        %v418 = vrot.slane %v399, 4
        %v419 = vsel %vm310, %v411, %v418
        %v420 = vpack.c.bf16 %v413, %v413
        %v421 = vpack.c.bf16 %v415, %v415
        %v422 = vpack.c.bf16 %v417, %v417
        %v423 = vpack.c.bf16 %v419, %v419
        %424 = vrot.lane.b32.xlu0 %v296, 96
        %v425 = vpop.permute.xlu0 %424
        %426 = vrot.lane.b32.xlu0 %v301, 96
        %v427 = vpop.permute.xlu0 %426
        %428 = vrot.lane.b32.xlu0 %v304, 96
        %v429 = vpop.permute.xlu0 %428
        %430 = vrot.lane.b32.xlu0 %v307, 96
        %v431 = vpop.permute.xlu0 %430
        %v436 = vrot.slane %v429, 4
        %v437 = vsel %vm310, %v436, %v425
        %v438 = vrot.slane %v425, 4
        %v439 = vsel %vm310, %v429, %v438
        %v441 = vunpack.c.l.s4 1983009808
        %v442 = vunpack.c.0.s8 %v441
        %v443 = vperm.slane %v437, %v442
        %v445 = vunpack.c.l.s4 1983009808
        %v446 = vunpack.c.0.s8 %v445
        %v447 = vperm.slane %v439, %v446
        %v448 = vrot.slane %v431, 4
        %v449 = vsel %vm310, %v448, %v427
        %v450 = vrot.slane %v427, 4
        %v451 = vsel %vm310, %v431, %v450
        %v453 = vunpack.c.l.s4 1983009808
        %v454 = vunpack.c.0.s8 %v453
        %v455 = vperm.slane %v449, %v454
        %v457 = vunpack.c.l.s4 1983009808
        %v458 = vunpack.c.0.s8 %v457
        %v459 = vperm.slane %v451, %v458
        %v460 = vrot.slane %v455, 4
        %v461 = vsel %vm310, %v460, %v443
        %v462 = vrot.slane %v443, 4
        %v463 = vsel %vm310, %v455, %v462
        %v465 = vunpack.c.l.s4 1934713408
        %v466 = vunpack.c.0.s8 %v465
        %v467 = vperm.slane %v461, %v466
        %v469 = vunpack.c.l.s4 1934713408
        %v470 = vunpack.c.0.s8 %v469
        %v471 = vperm.slane %v463, %v470
        %v472 = vrot.slane %v459, 4
        %v473 = vsel %vm310, %v472, %v447
        %v474 = vrot.slane %v447, 4
        %v475 = vsel %vm310, %v459, %v474
        %v477 = vunpack.c.l.s4 1934713408
        %v478 = vunpack.c.0.s8 %v477
        %v479 = vperm.slane %v473, %v478
        %v481 = vunpack.c.l.s4 1934713408
        %v482 = vunpack.c.0.s8 %v481
        %v483 = vperm.slane %v475, %v482
        %v484 = vrot.slane %v467, 4
        %v485 = vsel %vm310, 0.0, %v484
        %v486 = vrot.slane %v471, 4
        %v487 = vsel %vm310, 0.0, %v486
        %v488 = vrot.slane %v479, 4
        %v489 = vsel %vm310, 0.0, %v488
        %v490 = vrot.slane %v483, 4
        %v491 = vsel %vm310, 0.0, %v490
        %v492 = vsel %vm310, %v486, %v467
        %v494 = vunpack.c.l.s4 1983009808
        %v495 = vunpack.c.0.s8 %v494
        %v496 = vperm.slane %v492, %v495
        %v497 = vrot.slane %v487, 4
        %v498 = vsel %vm310, %v497, %v485
        %v500 = vunpack.c.l.s4 1983009808
        %v501 = vunpack.c.0.s8 %v500
        %v502 = vperm.slane %v498, %v501
        %v503 = vsel %vm310, %v490, %v479
        %v505 = vunpack.c.l.s4 1983009808
        %v506 = vunpack.c.0.s8 %v505
        %v507 = vperm.slane %v503, %v506
        %v508 = vrot.slane %v491, 4
        %v509 = vsel %vm310, %v508, %v489
        %v511 = vunpack.c.l.s4 1983009808
        %v512 = vunpack.c.0.s8 %v511
        %v513 = vperm.slane %v509, %v512
        %v514 = vrot.slane %v502, 4
        %v515 = vsel %vm310, %v514, %v496
        %v516 = vrot.slane %v496, 4
        %v517 = vsel %vm310, %v502, %v516
        %v519 = vunpack.c.l.s4 1934713408
        %v520 = vunpack.c.0.s8 %v519
        %v521 = vperm.slane %v515, %v520
        %v523 = vunpack.c.l.s4 1934713408
        %v524 = vunpack.c.0.s8 %v523
        %v525 = vperm.slane %v517, %v524
        %v526 = vrot.slane %v513, 4
        %v527 = vsel %vm310, %v526, %v507
        %v528 = vrot.slane %v507, 4
        %v529 = vsel %vm310, %v513, %v528
        %v531 = vunpack.c.l.s4 1934713408
        %v532 = vunpack.c.0.s8 %v531
        %v533 = vperm.slane %v527, %v532
        %v535 = vunpack.c.l.s4 1934713408
        %v536 = vunpack.c.0.s8 %v535
        %v537 = vperm.slane %v529, %v536
        %v538 = vrot.slane %v533, 4
        %v539 = vsel %vm310, %v538, %v521
        %v540 = vrot.slane %v521, 4
        %v541 = vsel %vm310, %v533, %v540
        %v542 = vrot.slane %v537, 4
        %v543 = vsel %vm310, %v542, %v525
        %v544 = vrot.slane %v525, 4
        %v545 = vsel %vm310, %v537, %v544
        %v546 = vpack.c.bf16 %v539, %v539
        %v547 = vpack.c.bf16 %v541, %v541
        %v548 = vpack.c.bf16 %v543, %v543
        %v549 = vpack.c.bf16 %v545, %v545
        %550 = vrot.lane.b32.xlu0 %v296, 64
        %v551 = vpop.permute.xlu0 %550
        %552 = vrot.lane.b32.xlu0 %v301, 64
        %v553 = vpop.permute.xlu0 %552
        %554 = vrot.lane.b32.xlu0 %v304, 64
        %v555 = vpop.permute.xlu0 %554
        %556 = vrot.lane.b32.xlu0 %v307, 64
        %v557 = vpop.permute.xlu0 %556
        %v562 = vrot.slane %v555, 4
        %v563 = vsel %vm310, %v562, %v551
        %v564 = vrot.slane %v551, 4
        %v565 = vsel %vm310, %v555, %v564
        %v567 = vunpack.c.l.s4 1983009808
        %v568 = vunpack.c.0.s8 %v567
        %v569 = vperm.slane %v563, %v568
        %v571 = vunpack.c.l.s4 1983009808
        %v572 = vunpack.c.0.s8 %v571
        %v573 = vperm.slane %v565, %v572
        %v574 = vrot.slane %v557, 4
        %v575 = vsel %vm310, %v574, %v553
        %v576 = vrot.slane %v553, 4
        %v577 = vsel %vm310, %v557, %v576
        %v579 = vunpack.c.l.s4 1983009808
        %v580 = vunpack.c.0.s8 %v579
        %v581 = vperm.slane %v575, %v580
        %v583 = vunpack.c.l.s4 1983009808
        %v584 = vunpack.c.0.s8 %v583
        %v585 = vperm.slane %v577, %v584
        %v586 = vrot.slane %v581, 4
        %v587 = vsel %vm310, %v586, %v569
        %v588 = vrot.slane %v569, 4
        %v589 = vsel %vm310, %v581, %v588
        %v591 = vunpack.c.l.s4 1934713408
        %v592 = vunpack.c.0.s8 %v591
        %v593 = vperm.slane %v587, %v592
        %v595 = vunpack.c.l.s4 1934713408
        %v596 = vunpack.c.0.s8 %v595
        %v597 = vperm.slane %v589, %v596
        %v598 = vrot.slane %v585, 4
        %v599 = vsel %vm310, %v598, %v573
        %v600 = vrot.slane %v573, 4
        %v601 = vsel %vm310, %v585, %v600
        %v603 = vunpack.c.l.s4 1934713408
        %v604 = vunpack.c.0.s8 %v603
        %v605 = vperm.slane %v599, %v604
        %v607 = vunpack.c.l.s4 1934713408
        %v608 = vunpack.c.0.s8 %v607
        %v609 = vperm.slane %v601, %v608
        %v610 = vrot.slane %v593, 4
        %v611 = vsel %vm310, 0.0, %v610
        %v612 = vrot.slane %v597, 4
        %v613 = vsel %vm310, 0.0, %v612
        %v614 = vrot.slane %v605, 4
        %v615 = vsel %vm310, 0.0, %v614
        %v616 = vrot.slane %v609, 4
        %v617 = vsel %vm310, 0.0, %v616
        %v618 = vsel %vm310, %v612, %v593
        %v620 = vunpack.c.l.s4 1983009808
        %v621 = vunpack.c.0.s8 %v620
        %v622 = vperm.slane %v618, %v621
        %v623 = vrot.slane %v613, 4
        %v624 = vsel %vm310, %v623, %v611
        %v626 = vunpack.c.l.s4 1983009808
        %v627 = vunpack.c.0.s8 %v626
        %v628 = vperm.slane %v624, %v627
        %v629 = vsel %vm310, %v616, %v605
        %v631 = vunpack.c.l.s4 1983009808
        %v632 = vunpack.c.0.s8 %v631
        %v633 = vperm.slane %v629, %v632
        %v634 = vrot.slane %v617, 4
        %v635 = vsel %vm310, %v634, %v615
        %v637 = vunpack.c.l.s4 1983009808
        %v638 = vunpack.c.0.s8 %v637
        %v639 = vperm.slane %v635, %v638
        %v640 = vrot.slane %v628, 4
        %v641 = vsel %vm310, %v640, %v622
        %v642 = vrot.slane %v622, 4
        %v643 = vsel %vm310, %v628, %v642
        %v645 = vunpack.c.l.s4 1934713408
        %v646 = vunpack.c.0.s8 %v645
        %v647 = vperm.slane %v641, %v646
        %v649 = vunpack.c.l.s4 1934713408
        %v650 = vunpack.c.0.s8 %v649
        %v651 = vperm.slane %v643, %v650
        %v652 = vrot.slane %v639, 4
        %v653 = vsel %vm310, %v652, %v633
        %v654 = vrot.slane %v633, 4
        %v655 = vsel %vm310, %v639, %v654
        %v657 = vunpack.c.l.s4 1934713408
        %v658 = vunpack.c.0.s8 %v657
        %v659 = vperm.slane %v653, %v658
        %v661 = vunpack.c.l.s4 1934713408
        %v662 = vunpack.c.0.s8 %v661
        %v663 = vperm.slane %v655, %v662
        %v664 = vrot.slane %v659, 4
        %v665 = vsel %vm310, %v664, %v647
        %v666 = vrot.slane %v647, 4
        %v667 = vsel %vm310, %v659, %v666
        %v668 = vrot.slane %v663, 4
        %v669 = vsel %vm310, %v668, %v651
        %v670 = vrot.slane %v651, 4
        %v671 = vsel %vm310, %v663, %v670
        %v672 = vpack.c.bf16 %v665, %v665
        %v673 = vpack.c.bf16 %v667, %v667
        %v674 = vpack.c.bf16 %v669, %v669
        %v675 = vpack.c.bf16 %v671, %v671
        %vm676 = vcmask 64512
        %v678 = vsel %vm676, %v420, 0
        %v681 = vsel %vm676, %v546, 0
        %683 = vmatpush.bf16.xpose.msra.mxu0 0
        %684 = vmatpush.bf16.xpose.msra.mxu0 0
        %685 = vmatpush.bf16.xpose.msra.mxu0 0
        %686 = vmatpush.bf16.xpose.msra.mxu0 0
        %687 = vmatpush.bf16.xpose.msra.mxu0 0
        %688 = vmatpush.bf16.xpose.msra.mxu0 0
        %689 = vmatpush.bf16.xpose.msra.mxu0 0
        %690 = vmatpush.bf16.xpose.msra.mxu0 %v681
        %691 = vmatmul.bf16.gmra.mxu0 %v678
        %v692 = vpop.f32.mrf.mxu0
        %v693 = vadd.f32 0.0, %v692
        %v694 = vpop.f32.mrf.mxu0
        %695 = vdwg.mxu0
        %v697 = vsel %vm676, %v421, 0
        %v700 = vsel %vm676, %v547, 0
        %702 = vmatpush.bf16.xpose.msra.mxu0 0
        %703 = vmatpush.bf16.xpose.msra.mxu0 0
        %704 = vmatpush.bf16.xpose.msra.mxu0 0
        %705 = vmatpush.bf16.xpose.msra.mxu0 0
        %706 = vmatpush.bf16.xpose.msra.mxu0 0
        %707 = vmatpush.bf16.xpose.msra.mxu0 0
        %708 = vmatpush.bf16.xpose.msra.mxu0 0
        %709 = vmatpush.bf16.xpose.msra.mxu0 %v700
        %710 = vmatmul.bf16.gmra.mxu0 %v697
        %v711 = vpop.f32.mrf.mxu0
        %v712 = vadd.f32 0.0, %v711
        %v713 = vpop.f32.mrf.mxu0
        %714 = vdwg.mxu0
        %v716 = vsel %vm676, %v422, 0
        %v719 = vsel %vm676, %v548, 0
        %721 = vmatpush.bf16.xpose.msra.mxu0 0
        %722 = vmatpush.bf16.xpose.msra.mxu0 0
        %723 = vmatpush.bf16.xpose.msra.mxu0 0
        %724 = vmatpush.bf16.xpose.msra.mxu0 0
        %725 = vmatpush.bf16.xpose.msra.mxu0 0
        %726 = vmatpush.bf16.xpose.msra.mxu0 0
        %727 = vmatpush.bf16.xpose.msra.mxu0 0
        %728 = vmatpush.bf16.xpose.msra.mxu0 %v719
        %729 = vmatmul.bf16.gmra.mxu0 %v716
        %v730 = vpop.f32.mrf.mxu0
        %v731 = vadd.f32 0.0, %v730
        %v732 = vpop.f32.mrf.mxu0
        %733 = vdwg.mxu0
        %v735 = vsel %vm676, %v423, 0
        %v738 = vsel %vm676, %v549, 0
        %740 = vmatpush.bf16.xpose.msra.mxu0 0
        %741 = vmatpush.bf16.xpose.msra.mxu0 0
        %742 = vmatpush.bf16.xpose.msra.mxu0 0
        %743 = vmatpush.bf16.xpose.msra.mxu0 0
        %744 = vmatpush.bf16.xpose.msra.mxu0 0
        %745 = vmatpush.bf16.xpose.msra.mxu0 0
        %746 = vmatpush.bf16.xpose.msra.mxu0 0
        %747 = vmatpush.bf16.xpose.msra.mxu0 %v738
        %748 = vmatmul.bf16.gmra.mxu0 %v735
        %v749 = vpop.f32.mrf.mxu0
        %v750 = vadd.f32 0.0, %v749
        %v751 = vpop.f32.mrf.mxu0
        %752 = vdwg.mxu0
        %v753 = vmul.f32 %v693, 0.35355338
        %v754 = vmul.f32 %v712, 0.35355338
        %v755 = vmul.f32 %v731, 0.35355338
        %v756 = vmul.f32 %v750, 0.35355338
        %v757 = vld [vmem:[%s259] sm:$0x1]
        %v759 = vperm.slane %v757, 0
        %v761 = vadd.f32 %v753, %v759
        %v762 = vadd.f32 %v754, %v759
        %v763 = vadd.f32 %v755, %v759
        %v764 = vadd.f32 %v756, %v759
        %v765 = vsel %vm676, %v761, -inf
        %766 = vmax.xlane.f32.xlu0 %v765
        %v767 = vpop.xlane.xlu0 %766
        %v768 = vsel %vm676, %v762, -inf
        %769 = vmax.xlane.f32.xlu0 %v768
        %v770 = vpop.xlane.xlu0 %769
        %v771 = vsel %vm676, %v763, -inf
        %772 = vmax.xlane.f32.xlu0 %v771
        %v773 = vpop.xlane.xlu0 %772
        %v774 = vsel %vm676, %v764, -inf
        %775 = vmax.xlane.f32.xlu0 %v774
        %v776 = vpop.xlane.xlu0 %775
        %v777 = vsub.f32 %v761, %v767
        %v778 = vsub.f32 %v762, %v770
        %v779 = vsub.f32 %v763, %v773
        %v780 = vsub.f32 %v764, %v776
        %v781 = vmul.f32 %v777, 1.442695
        %v782 = vpow.pop %v781
        %v783 = vmul.f32 %v778, 1.442695
        %v784 = vpow.pop %v783
        %v785 = vmul.f32 %v779, 1.442695
        %v786 = vpow.pop %v785
        %v787 = vmul.f32 %v780, 1.442695
        %v788 = vpow.pop %v787
        %v789 = vsel %vm676, %v782, 0.0
        %790 = vadd.xlane.f32.xlu0 %v789
        %v791 = vpop.xlane.xlu0 %790
        %v792 = vsel %vm676, %v784, 0.0
        %793 = vadd.xlane.f32.xlu0 %v792
        %v794 = vpop.xlane.xlu0 %793
        %v795 = vsel %vm676, %v786, 0.0
        %796 = vadd.xlane.f32.xlu0 %v795
        %v797 = vpop.xlane.xlu0 %796
        %v798 = vsel %vm676, %v788, 0.0
        %799 = vadd.xlane.f32.xlu0 %v798
        %v800 = vpop.xlane.xlu0 %799
        %v801 = vrcp.pop %v791
        %v802 = vrcp.pop %v794
        %v803 = vrcp.pop %v797
        %v804 = vrcp.pop %v800
        %v805 = vmul.f32 %v782, %v801
        %v806 = vmul.f32 %v784, %v802
        %v807 = vmul.f32 %v786, %v803
        %v808 = vmul.f32 %v788, %v804
        %v809 = vpack.c.bf16 %v805, %v805
        %v810 = vpack.c.bf16 %v806, %v806
        %v811 = vpack.c.bf16 %v807, %v807
        %v812 = vpack.c.bf16 %v808, %v808
        %v814 = vsel %vm676, %v809, 0
        %vm816 = vcmask 1043456
        %v818 = vsel %vm816, %v672, 0
        %820 = vmatpush.bf16.msra.mxu0 0
        %821 = vmatpush.bf16.msra.mxu0 0
        %822 = vmatpush.bf16.msra.mxu0 0
        %823 = vmatpush.bf16.msra.mxu0 0
        %824 = vmatpush.bf16.msra.mxu0 0
        %825 = vmatpush.bf16.msra.mxu0 0
        %826 = vmatpush.bf16.msra.mxu0 0
        %827 = vmatpush.bf16.msra.mxu0 %v818
        %828 = vmatmul.bf16.gmra.mxu0 %v814
        %v829 = vpop.f32.mrf.mxu0
        %v830 = vadd.f32 0.0, %v829
        %v831 = vpop.f32.mrf.mxu0
        %832 = vdwg.mxu0
        %v834 = vsel %vm676, %v810, 0
        %v837 = vsel %vm816, %v673, 0
        %839 = vmatpush.bf16.msra.mxu0 0
        %840 = vmatpush.bf16.msra.mxu0 0
        %841 = vmatpush.bf16.msra.mxu0 0
        %842 = vmatpush.bf16.msra.mxu0 0
        %843 = vmatpush.bf16.msra.mxu0 0
        %844 = vmatpush.bf16.msra.mxu0 0
        %845 = vmatpush.bf16.msra.mxu0 0
        %846 = vmatpush.bf16.msra.mxu0 %v837
        %847 = vmatmul.bf16.gmra.mxu0 %v834
        %v848 = vpop.f32.mrf.mxu0
        %v849 = vadd.f32 0.0, %v848
        %v850 = vpop.f32.mrf.mxu0
        %851 = vdwg.mxu0
        %v853 = vsel %vm676, %v811, 0
        %v856 = vsel %vm816, %v674, 0
        %858 = vmatpush.bf16.msra.mxu0 0
        %859 = vmatpush.bf16.msra.mxu0 0
        %860 = vmatpush.bf16.msra.mxu0 0
        %861 = vmatpush.bf16.msra.mxu0 0
        %862 = vmatpush.bf16.msra.mxu0 0
        %863 = vmatpush.bf16.msra.mxu0 0
        %864 = vmatpush.bf16.msra.mxu0 0
        %865 = vmatpush.bf16.msra.mxu0 %v856
        %866 = vmatmul.bf16.gmra.mxu0 %v853
        %v867 = vpop.f32.mrf.mxu0
        %v868 = vadd.f32 0.0, %v867
        %v869 = vpop.f32.mrf.mxu0
        %870 = vdwg.mxu0
        %v872 = vsel %vm676, %v812, 0
        %v875 = vsel %vm816, %v675, 0
        %877 = vmatpush.bf16.msra.mxu0 0
        %878 = vmatpush.bf16.msra.mxu0 0
        %879 = vmatpush.bf16.msra.mxu0 0
        %880 = vmatpush.bf16.msra.mxu0 0
        %881 = vmatpush.bf16.msra.mxu0 0
        %882 = vmatpush.bf16.msra.mxu0 0
        %883 = vmatpush.bf16.msra.mxu0 0
        %884 = vmatpush.bf16.msra.mxu0 %v875
        %885 = vmatmul.bf16.gmra.mxu0 %v872
        %v886 = vpop.f32.mrf.mxu0
        %v887 = vadd.f32 0.0, %v886
        %v888 = vpop.f32.mrf.mxu0
        %889 = vdwg.mxu0
        %v890 = vrot.slane %v868, 4
        %v891 = vsel %vm310, %v890, %v830
        %v892 = vrot.slane %v830, 4
        %v893 = vsel %vm310, %v868, %v892
        %v895 = vunpack.c.l.s4 1983009808
        %v896 = vunpack.c.0.s8 %v895
        %v897 = vperm.slane %v891, %v896
        %v899 = vunpack.c.l.s4 1983009808
        %v900 = vunpack.c.0.s8 %v899
        %v901 = vperm.slane %v893, %v900
        %v902 = vrot.slane %v887, 4
        %v903 = vsel %vm310, %v902, %v849
        %v904 = vrot.slane %v849, 4
        %v905 = vsel %vm310, %v887, %v904
        %v907 = vunpack.c.l.s4 1983009808
        %v908 = vunpack.c.0.s8 %v907
        %v909 = vperm.slane %v903, %v908
        %v911 = vunpack.c.l.s4 1983009808
        %v912 = vunpack.c.0.s8 %v911
        %v913 = vperm.slane %v905, %v912
        %v914 = vrot.slane %v909, 4
        %v915 = vsel %vm310, %v914, %v897
        %v916 = vrot.slane %v897, 4
        %v917 = vsel %vm310, %v909, %v916
        %v919 = vunpack.c.l.s4 1934713408
        %v920 = vunpack.c.0.s8 %v919
        %v921 = vperm.slane %v915, %v920
        %v923 = vunpack.c.l.s4 1934713408
        %v924 = vunpack.c.0.s8 %v923
        %v925 = vperm.slane %v917, %v924
        %v926 = vrot.slane %v913, 4
        %v927 = vsel %vm310, %v926, %v901
        %v928 = vrot.slane %v901, 4
        %v929 = vsel %vm310, %v913, %v928
        %v931 = vunpack.c.l.s4 1934713408
        %v932 = vunpack.c.0.s8 %v931
        %v933 = vperm.slane %v927, %v932
        %v935 = vunpack.c.l.s4 1934713408
        %v936 = vunpack.c.0.s8 %v935
        %v937 = vperm.slane %v929, %v936
        %v938 = vrot.slane %v921, 4
        %v939 = vsel %vm310, 0.0, %v938
        %v940 = vrot.slane %v925, 4
        %v941 = vsel %vm310, 0.0, %v940
        %v942 = vrot.slane %v933, 4
        %v943 = vsel %vm310, 0.0, %v942
        %v944 = vrot.slane %v937, 4
        %v945 = vsel %vm310, 0.0, %v944
        %v946 = vsel %vm310, %v940, %v921
        %v948 = vunpack.c.l.s4 1983009808
        %v949 = vunpack.c.0.s8 %v948
        %v950 = vperm.slane %v946, %v949
        %v951 = vrot.slane %v941, 4
        %v952 = vsel %vm310, %v951, %v939
        %v954 = vunpack.c.l.s4 1983009808
        %v955 = vunpack.c.0.s8 %v954
        %v956 = vperm.slane %v952, %v955
        %v957 = vsel %vm310, %v944, %v933
        %v959 = vunpack.c.l.s4 1983009808
        %v960 = vunpack.c.0.s8 %v959
        %v961 = vperm.slane %v957, %v960
        %v962 = vrot.slane %v945, 4
        %v963 = vsel %vm310, %v962, %v943
        %v965 = vunpack.c.l.s4 1983009808
        %v966 = vunpack.c.0.s8 %v965
        %v967 = vperm.slane %v963, %v966
        %v968 = vrot.slane %v956, 4
        %v969 = vsel %vm310, %v968, %v950
        %v970 = vrot.slane %v950, 4
        %v971 = vsel %vm310, %v956, %v970
        %v973 = vunpack.c.l.s4 1934713408
        %v974 = vunpack.c.0.s8 %v973
        %v975 = vperm.slane %v969, %v974
        %v977 = vunpack.c.l.s4 1934713408
        %v978 = vunpack.c.0.s8 %v977
        %v979 = vperm.slane %v971, %v978
        %v980 = vrot.slane %v967, 4
        %v981 = vsel %vm310, %v980, %v961
        %v982 = vrot.slane %v961, 4
        %v983 = vsel %vm310, %v967, %v982
        %v985 = vunpack.c.l.s4 1934713408
        %v986 = vunpack.c.0.s8 %v985
        %v987 = vperm.slane %v981, %v986
        %v989 = vunpack.c.l.s4 1934713408
        %v990 = vunpack.c.0.s8 %v989
        %v991 = vperm.slane %v983, %v990
        %v992 = vrot.slane %v987, 4
        %v993 = vsel %vm310, %v992, %v975
        %v994 = vrot.slane %v975, 4
        %v995 = vsel %vm310, %v987, %v994
        %v996 = vrot.slane %v991, 4
        %v997 = vsel %vm310, %v996, %v979
        %v998 = vrot.slane %v979, 4
        %v999 = vsel %vm310, %v991, %v998
        %1001 = vrot.lane.b32.xlu0 %v995, 8
        %v1002 = vpop.permute.xlu0 %1001
        %1005 = vrot.lane.b32.xlu0 %v997, 16
        %v1006 = vpop.permute.xlu0 %1005
        %1009 = vrot.lane.b32.xlu0 %v999, 24
        %v1010 = vpop.permute.xlu0 %1009
        %v1012 = vsel %vm676, %v993, %v1002
        %vm1013 = vcmask 130048
        %v1014 = vsel %vm1013, %v1012, %v1006
        %vm1015 = vcmask 195584
        %v1016 = vsel %vm1015, %v1014, %v1010
        %1017 = vst.msk [vmem:[%s256] sm:$0xff] %vm282, %v1016
        %s1018 = sand.u32 %s124, 1
        %s1019 = scalar_lea.sflag [#allocation4], %s1018
        %s1020 = sand.u32 %s124, 1
        %s1021 = smul.addr %s1020, 8
        %s1022 = scalar_lea.vmem [#allocation8], %s1021
        // Predicated region
        $region49: #{tpu_custom_call.1} parent=35 // pred_check
          %p1023 = pneg %p134
        $region50: #{tpu_custom_call.1} parent=35 // pred_check_branch
          %1025 = sbr.rel (%p1023) target = $region52
        $region51: #{tpu_custom_call.1} parent=35 // pred_region
          %1027 = vsyncadd %s1019, 0
          %s1028 = smul.addr %s22, 8
          %s1029 = scalar_lea.hbm %s4, %s1028
          %s1031 = sshll.u32 %s1022, 4
          %s1032 = int_to_ptr.vmem [resolvable:$true] %s1031
          %s1033 = sshll.u32 %s1029, 4
          %s1034 = int_to_ptr.hbm [resolvable:$true] %s1033
          %1036 = dma.vmem_to_hbm [thread:$0]  %s1032, 128, %s1034, %s1019
        $region52: #{tpu_custom_call.1} parent=35 // pred_fallthru
          _
      $region36: #{tpu_custom_call.1} parent=5 // pred_fallthru
        _
      %p1037 = scmp.le.s32.totalorder 2, %s17
      // Predicated region
      $region53: #{tpu_custom_call.1} parent=5 // pred_check
        %p1038 = pneg %p1037
      $region54: #{tpu_custom_call.1} parent=5 // pred_check_branch
        %1040 = sbr.rel (%p1038) target = $region56
      $region55: #{tpu_custom_call.1} parent=5 // pred_region
        %s1041 = ssub.s32 %s17, 2
        // Predicated region
        $region57: #{tpu_custom_call.1} parent=55 // pred_check
          %p1042 = pneg %p140
        $region58: #{tpu_custom_call.1} parent=55 // pred_check_branch
          %1044 = sbr.rel (%p1042) target = $region60
        $region59: #{tpu_custom_call.1} parent=55 // pred_region
          %s1045 = sand.u32 %s125, 1
          %s1046 = scalar_lea.sflag [#allocation4], %s1045
          %s1047 = sand.u32 %s125, 1
          %s1048 = smul.addr %s1047, 8
          %s1049 = scalar_lea.vmem [#allocation8], %s1048
          %1051 = dma.done %s1046, 128
        $region60: #{tpu_custom_call.1} parent=55 // pred_fallthru
          _
      $region56: #{tpu_custom_call.1} parent=5 // pred_fallthru
        _
    $region6: #{tpu_custom_call.1} parent=1 // loop_footer
      %s21 = sadd.s32 1, %s17
    $region7: #{tpu_custom_call.1} parent=1 // loop_footer_branch
      %16 = sbr.rel target = $region3
    $region8: #{tpu_custom_call.1} parent=1 // loop_exit
      _
    %1052 = vsyncpa [#allocation3], 1
    %s1053 = scalar_lea.sflag [#allocation3], 1
    %1054 = vsyncpa %s1053, 1
    %1055 = vsyncpa [#allocation6], 1
    %1056 = vsyncpa [#allocation4], 1
    %s1057 = scalar_lea.sflag [#allocation4], 1
    %1058 = vsyncpa %s1057, 1

</llo_original>
